<compile_context>
chip_gen: v7x
topology: tpu7x:2x2x1
jax: 0.10.0
libtpu: 0.0.40
codegen_flags: <defaults>
</compile_context>

<pallas_src>
import jax
import jax.numpy as jnp
from jax.experimental import pallas as pl
from jax.experimental.pallas import tpu as pltpu


def channel_attention_kernel(h_ref, feats_ref, wv_t_ref, wa_t_ref, out_ref):
    # Block shapes per grid step:
    #   h_ref    : (bt, 1, A)   -- wh(mean_S(key)) + wh_b + wv_b, per batch item
    #   feats_ref: (bt, tn, F)
    #   wv_t_ref : (F, A)
    #   wa_t_ref : (A, H)       (H == F)
    #   out_ref  : (bt, tn, F)
    bt, tn, F = feats_ref.shape
    A = wv_t_ref.shape[1]
    H = wa_t_ref.shape[1]

    feats = feats_ref[...]                       # (bt, tn, F), native dtype
    feats2 = feats.reshape(bt * tn, F)           # fuse batch rows into M

    # wv(feats): (bt*tn, A) -- MXU, native-dtype operands, f32 accumulation.
    v = jnp.dot(feats2, wv_t_ref[...], preferred_element_type=jnp.float32)

    # inputs = (wh(key_pool) + wh_b + wv_b) + wv(feats); biases were folded
    # into `h` in the wrapper, so a single broadcast-add over the tn axis.
    inputs = v.reshape(bt, tn, A) + h_ref[...]   # (bt, tn, A), f32

    # alpha = sigmoid(wa(tanh(inputs))): tanh/sigmoid on the VPU/EUP in f32,
    # matmul operands follow the weight dtype, f32 accumulation on the MXU.
    t = jnp.tanh(inputs).reshape(bt * tn, A).astype(wa_t_ref.dtype)
    alpha = jax.nn.sigmoid(
        jnp.dot(t, wa_t_ref[...], preferred_element_type=jnp.float32))

    # att_feats = alpha * feats   (requires H == F, as in the PyTorch module)
    out_ref[...] = (alpha.reshape(bt, tn, H) * feats).astype(out_ref.dtype)


def _largest_divisor_leq(n, cap):
    cap = max(1, min(n, cap))
    for d in range(cap, 0, -1):
        if n % d == 0:
            return d
    return 1


def _pick_feat_tile(n, cap=512):
    # Second-to-last block dim must be a multiple of 8 or equal the full dim.
    if n <= cap:
        return n
    for d in range(cap - cap % 8, 0, -8):
        if d > 0 and n % d == 0:
            return d
    return n


def channel_attention(key, feats, wh_w, wh_b, wv_w, wv_b, wa_w):
    """key: (B,S,H); feats: (B,N,F); wh_w: (A,H); wh_b: (A,); wv_w: (A,F);
    wv_b: (A,); wa_w: (H,A).  Returns att_feats: (B,N,F)."""
    B, S, H = key.shape
    _, N, F = feats.shape
    A = wh_w.shape[0]
    assert H == F, "alpha * feats broadcast requires hidden_size == feat_size"

    # --- hoisted glue: seq-mean pooling + wh Linear, with both biases folded.
    key_pool = jnp.mean(key.astype(jnp.float32), axis=1)            # (B, H)
    h = (key_pool @ wh_w.astype(jnp.float32).T
         + wh_b.astype(jnp.float32) + wv_b.astype(jnp.float32))     # (B, A)
    h = h.reshape(B, 1, A)

    # Pre-transpose weights so the kernel does lane-friendly x @ W_T.
    wv_t = wv_w.T            # (F, A)
    wa_t = wa_w.T            # (A, H)

    # --- tiling: fuse batch rows into the matmul M dim, tile feat_num.
    tn = _pick_feat_tile(N)                                  # feat_num tile
    rows_target = max(1, 512 // max(tn, 1))
    bt = _largest_divisor_leq(B, rows_target)                # batch items/step
    grid = (B // bt, N // tn)

    grid_spec = pltpu.PrefetchScalarGridSpec(
        num_scalar_prefetch=0,
        grid=grid,
        in_specs=[
            pl.BlockSpec((bt, 1, A), lambda bi, ni: (bi, 0, 0)),    # h
            pl.BlockSpec((bt, tn, F), lambda bi, ni: (bi, ni, 0)),  # feats
            pl.BlockSpec((F, A), lambda bi, ni: (0, 0)),            # wv_t
            pl.BlockSpec((A, H), lambda bi, ni: (0, 0)),            # wa_t
        ],
        out_specs=pl.BlockSpec((bt, tn, F), lambda bi, ni: (bi, ni, 0)),
    )

    return pl.pallas_call(
        channel_attention_kernel,
        out_shape=jax.ShapeDtypeStruct((B, N, F), feats.dtype),
        grid_spec=grid_spec,
        compiler_params=pltpu.CompilerParams(
            dimension_semantics=("parallel", "parallel"),
            vmem_limit_bytes=64 * 1024 * 1024),
    )(h, feats, wv_t, wa_t)


def xavier_normal(rng, shape):
    # shape = (out_features, in_features), gain = 1 (matches nn.init.xavier_normal_)
    fan_out, fan_in = shape
    std = (2.0 / (fan_in + fan_out)) ** 0.5
    return std * jax.random.normal(rng, shape, dtype=jnp.float32)


def reference(key, feats, wh_w, wh_b, wv_w, wv_b, wa_w):
    key_pool = jnp.mean(key, axis=1, keepdims=True)           # (B,1,H)
    h = key_pool @ wh_w.T + wh_b                               # (B,1,A)
    v = feats @ wv_w.T + wv_b                                  # (B,N,A)
    alpha = jax.nn.sigmoid(jnp.tanh(h + v) @ wa_w.T)           # (B,N,H)
    return alpha * feats


if __name__ == "__main__":
    # Small shapes consistent with the module (hidden_size == feat_size).
    B, S, N = 2, 8, 8
    feat_size = 32
    hidden_size = 32
    att_size = 32

    root = jax.random.PRNGKey(0)
    k_key, k_feats, k_wh, k_wv, k_wa = jax.random.split(root, 5)

    key_in = jax.random.normal(k_key, (B, S, hidden_size), dtype=jnp.float32)
    feats = jax.random.normal(k_feats, (B, N, feat_size), dtype=jnp.float32)

    wh_w = xavier_normal(k_wh, (att_size, hidden_size))
    wh_b = jnp.zeros((att_size,), dtype=jnp.float32)  # deterministic bias init
    wv_w = xavier_normal(k_wv, (att_size, feat_size))
    wv_b = jnp.zeros((att_size,), dtype=jnp.float32)
    wa_w = xavier_normal(k_wa, (hidden_size, att_size))  # bias=False

    out = channel_attention(key_in, feats, wh_w, wh_b, wv_w, wv_b, wa_w)
    out = jax.block_until_ready(out)

    ref = reference(key_in, feats, wh_w, wh_b, wv_w, wv_b, wa_w)
    assert out.shape == (B, N, feat_size)
    assert jnp.allclose(out, ref, atol=1e-5, rtol=1e-5)

    print("KERNEL_OK")
</pallas_src>

<mosaic_0001>
module attributes {stable_mosaic.version = 11 : i64} {
  func.func @channel_attention_kernel(%arg0: i32, %arg1: i32, %arg2: memref<2x1x32xf32, #tpu.memory_space<vmem>>, %arg3: memref<2x8x32xf32, #tpu.memory_space<vmem>>, %arg4: memref<32x32xf32, #tpu.memory_space<vmem>>, %arg5: memref<32x32xf32, #tpu.memory_space<vmem>>, %arg6: memref<2x8x32xf32, #tpu.memory_space<vmem>>) attributes {dimension_semantics = [#tpu.dimension_semantics<parallel>, #tpu.dimension_semantics<parallel>], iteration_bounds = array<i64: 1, 1>, scalar_prefetch = 0 : i64, scratch_operands = 0 : i64, tpu.core_type = #tpu.core_type<tc>, window_params = [{transform_indices = @transform_0, window_bounds = array<i64: 2, 1, 32>}, {transform_indices = @transform_1, window_bounds = array<i64: 2, 8, 32>}, {pipeline_mode = #tpu.pipeline_mode<synchronous>, transform_indices = @transform_2, window_bounds = array<i64: 32, 32>}, {pipeline_mode = #tpu.pipeline_mode<synchronous>, transform_indices = @transform_3, window_bounds = array<i64: 32, 32>}, {transform_indices = @transform_4, window_bounds = array<i64: 2, 8, 32>}]} {
    %c0 = arith.constant 0 : index
    %c0_0 = arith.constant 0 : index
    %c0_1 = arith.constant 0 : index
    %0 = vector.load %arg3[%c0, %c0_0, %c0_1] : memref<2x8x32xf32, #tpu.memory_space<vmem>>, vector<2x8x32xf32>
    %1 = vector.shape_cast %0 : vector<2x8x32xf32> to vector<16x32xf32>
    %c0_2 = arith.constant 0 : index
    %c0_3 = arith.constant 0 : index
    %2 = vector.load %arg4[%c0_2, %c0_3] : memref<32x32xf32, #tpu.memory_space<vmem>>, vector<32x32xf32>
    %cst = arith.constant dense<0.000000e+00> : vector<16x32xf32>
    %3 = tpu.matmul %1, %2, %cst {dimension_numbers = #tpu.dot_dimension_numbers<[1], [0], [0], [1], [0, 0, 1, 1], [], []>} : vector<16x32xf32>, vector<32x32xf32>, vector<16x32xf32> -> vector<16x32xf32>
    %4 = vector.shape_cast %3 : vector<16x32xf32> to vector<2x8x32xf32>
    %c0_4 = arith.constant 0 : index
    %c0_5 = arith.constant 0 : index
    %c0_6 = arith.constant 0 : index
    %5 = vector.load %arg2[%c0_4, %c0_5, %c0_6] : memref<2x1x32xf32, #tpu.memory_space<vmem>>, vector<2x1x32xf32>
    %6 = vector.broadcast %5 : vector<2x1x32xf32> to vector<2x8x32xf32>
    %7 = arith.addf %4, %6 : vector<2x8x32xf32>
    %8 = math.tanh %7 : vector<2x8x32xf32>
    %9 = vector.shape_cast %8 : vector<2x8x32xf32> to vector<16x32xf32>
    %c0_7 = arith.constant 0 : index
    %c0_8 = arith.constant 0 : index
    %10 = vector.load %arg5[%c0_7, %c0_8] : memref<32x32xf32, #tpu.memory_space<vmem>>, vector<32x32xf32>
    %cst_9 = arith.constant dense<0.000000e+00> : vector<16x32xf32>
    %11 = tpu.matmul %9, %10, %cst_9 {dimension_numbers = #tpu.dot_dimension_numbers<[1], [0], [0], [1], [0, 0, 1, 1], [], []>} : vector<16x32xf32>, vector<32x32xf32>, vector<16x32xf32> -> vector<16x32xf32>
    %12 = arith.negf %11 : vector<16x32xf32>
    %13 = math.exp %12 : vector<16x32xf32>
    %cst_10 = arith.constant 1.000000e+00 : f32
    %14 = vector.broadcast %cst_10 : f32 to vector<16x32xf32>
    %15 = arith.addf %14, %13 : vector<16x32xf32>
    %16 = arith.divf %14, %15 : vector<16x32xf32>
    %17 = vector.shape_cast %16 : vector<16x32xf32> to vector<2x8x32xf32>
    %18 = arith.mulf %17, %0 : vector<2x8x32xf32>
    %c0_11 = arith.constant 0 : index
    %c0_12 = arith.constant 0 : index
    %c0_13 = arith.constant 0 : index
    %19 = vector.load %arg6[%c0_11, %c0_12, %c0_13] : memref<2x8x32xf32, #tpu.memory_space<vmem>>, vector<2x8x32xf32>
    tpu.vector_store %arg6[%c0_11, %c0_12, %c0_13], %18 {strides = array<i32>} : memref<2x8x32xf32, #tpu.memory_space<vmem>>, vector<2x8x32xf32>,
    return
  }
  func.func @transform_0(%arg0: i32, %arg1: i32) -> (i32, i32, i32) {
    %c0_i32 = arith.constant 0 : i32
    %c0_i32_0 = arith.constant 0 : i32
    %c0_i32_1 = arith.constant 0 : i32
    return %arg0, %c0_i32, %c0_i32_0 : i32, i32, i32
  }
  func.func @transform_1(%arg0: i32, %arg1: i32) -> (i32, i32, i32) {
    %c0_i32 = arith.constant 0 : i32
    %c0_i32_0 = arith.constant 0 : i32
    return %arg0, %arg1, %c0_i32 : i32, i32, i32
  }
  func.func @transform_2(%arg0: i32, %arg1: i32) -> (i32, i32) {
    %c0_i32 = arith.constant 0 : i32
    %c0_i32_0 = arith.constant 0 : i32
    %c0_i32_1 = arith.constant 0 : i32
    return %c0_i32, %c0_i32_0 : i32, i32
  }
  func.func @transform_3(%arg0: i32, %arg1: i32) -> (i32, i32) {
    %c0_i32 = arith.constant 0 : i32
    %c0_i32_0 = arith.constant 0 : i32
    %c0_i32_1 = arith.constant 0 : i32
    return %c0_i32, %c0_i32_0 : i32, i32
  }
  func.func @transform_4(%arg0: i32, %arg1: i32) -> (i32, i32, i32) {
    %c0_i32 = arith.constant 0 : i32
    %c0_i32_0 = arith.constant 0 : i32
    return %arg0, %arg1, %c0_i32 : i32, i32, i32
  }
}

</mosaic_0001>

<llo_original>
// kernel: tpu_custom_call.1
$region0: #{tpu_custom_call.1}
  #allocation0 [shape = 'u32[]', space=smem, size = 0x4, offset = 0x4, fixed_abs, tag = 'smem constant byte address 0x4 - core index']
  #allocation1 [shape = 'u32[144,128]{1,0:T(1,128)}', space=vmem, size = 0x12000, scoped, tag = 'internal scratch']
  %s0 = inlined_call_operand.hbm [shape: f32[2,1,32], index: 0, kind: input, shape index: {}]
  %s1 = inlined_call_operand.hbm [shape: f32[2,8,32], index: 1, kind: input, shape index: {}]
  %s2 = inlined_call_operand.hbm [shape: f32[32,32], index: 2, kind: input, shape index: {}]
  %s3 = inlined_call_operand.hbm [shape: f32[32,32], index: 3, kind: input, shape index: {}]
  %s4 = inlined_call_operand.hbm [shape: f32[2,8,32], index: 4, kind: output, shape index: {}]
  %s5 = sld [smem:[#allocation0]]
  $region42: #{tpu_custom_call.1} parent=0
    _
  %s7 = ssub.s32 1, %s5
  %s8 = scalar_select 0, %s7, %s5
  $region1: #{tpu_custom_call.1} parent=0
    #allocation2 [shape = 'u8[1024]{0}', space=vmem, size = 0x400, scoped, tag = 'input window, operand 0, single buffered']
    #allocation3 [shape = 's32[1]{0}', space=sflag, size = 0x4, scoped, tag = 'scoped memory for tpu_custom_call.1']
    #allocation4 [shape = 's32[1]{0}', space=sflag, size = 0x4, scoped, tag = 'scoped memory for tpu_custom_call.1']
    #allocation5 [shape = 'u8[8192]{0}', space=vmem, size = 0x2000, scoped, tag = 'input window, operand 1, single buffered']
    #allocation6 [shape = 's32[1]{0}', space=sflag, size = 0x4, scoped, tag = 'scoped memory for tpu_custom_call.1']
    #allocation7 [shape = 'u8[16384]{0}', space=vmem, size = 0x4000, scoped, tag = 'input window, operand 2, single buffered']
    #allocation8 [shape = 'u8[16384]{0}', space=vmem, size = 0x4000, scoped, tag = 'input window, operand 3, single buffered']
    #allocation9 [shape = 's32[1]{0}', space=sflag, size = 0x4, scoped, tag = 'scoped memory for tpu_custom_call.1']
    #allocation10 [shape = 'u8[8192]{0}', space=vmem, size = 0x2000, scoped, tag = 'output window, operand 0, single buffered']
    %9 = vsyncpa [#allocation3], 0
    %10 = vsyncpa [#allocation6], 0
    %11 = vsyncpa [#allocation9], 0
    %12 = vsyncpa [#allocation4], 0
    // Predicated region
    $region2: #{tpu_custom_call.1} parent=1 // pred_check
      _
    $region3: #{tpu_custom_call.1} parent=1 // pred_check_branch
      %14 = sbr.rel (0) target = $region5
    $region4: #{tpu_custom_call.1} parent=1 // pred_region
      %s16 = ssub.s32 32, 32
      %17 = vsyncadd [#allocation3], %s16
      %s18 = sshll.u32 [#allocation2], 4
      %s19 = int_to_ptr.vmem [resolvable:$true] %s18
      %24 = dma.hbm_to_vmem [thread:$0]  %s0, 32, %s19, [#allocation3], 16, 16, 1
    $region5: #{tpu_custom_call.1} parent=1 // pred_fallthru
      _
    // Predicated region
    $region6: #{tpu_custom_call.1} parent=1 // pred_check
      _
    $region7: #{tpu_custom_call.1} parent=1 // pred_check_branch
      %26 = sbr.rel (0) target = $region9
    $region8: #{tpu_custom_call.1} parent=1 // pred_region
      %s28 = ssub.s32 256, 256
      %29 = vsyncadd [#allocation6], %s28
      %s30 = sshll.u32 [#allocation5], 4
      %s31 = int_to_ptr.vmem [resolvable:$true] %s30
      %36 = dma.hbm_to_vmem [thread:$0]  %s1, 256, %s31, [#allocation6], 128, 128, 8
    $region9: #{tpu_custom_call.1} parent=1 // pred_fallthru
      _
    // Predicated region
    $region10: #{tpu_custom_call.1} parent=1 // pred_check
      _
    $region11: #{tpu_custom_call.1} parent=1 // pred_check_branch
      %38 = sbr.rel (0) target = $region13
    $region12: #{tpu_custom_call.1} parent=1 // pred_region
      %s40 = ssub.s32 512, 512
      %41 = vsyncadd [#allocation6], %s40
      %s42 = sshll.u32 [#allocation7], 4
      %s43 = int_to_ptr.vmem [resolvable:$true] %s42
      %48 = dma.hbm_to_vmem [thread:$0]  %s2, 512, %s43, [#allocation6], 128, 128, 8
    $region13: #{tpu_custom_call.1} parent=1 // pred_fallthru
      _
    // Predicated region
    $region14: #{tpu_custom_call.1} parent=1 // pred_check
      _
    $region15: #{tpu_custom_call.1} parent=1 // pred_check_branch
      %50 = sbr.rel (0) target = $region17
    $region16: #{tpu_custom_call.1} parent=1 // pred_region
      %s52 = ssub.s32 512, 512
      %53 = vsyncadd [#allocation9], %s52
      %s54 = sshll.u32 [#allocation8], 4
      %s55 = int_to_ptr.vmem [resolvable:$true] %s54
      %60 = dma.hbm_to_vmem [thread:$0]  %s3, 512, %s55, [#allocation9], 128, 128, 8
    $region17: #{tpu_custom_call.1} parent=1 // pred_fallthru
      _
    // Predicated region
    $region18: #{tpu_custom_call.1} parent=1 // pred_check
      _
    $region19: #{tpu_custom_call.1} parent=1 // pred_check_branch
      %62 = sbr.rel (0) target = $region21
    $region20: #{tpu_custom_call.1} parent=1 // pred_region
      %63 = dma.done [#allocation3], 32
    $region21: #{tpu_custom_call.1} parent=1 // pred_fallthru
      _
    // Predicated region
    $region22: #{tpu_custom_call.1} parent=1 // pred_check
      _
    $region23: #{tpu_custom_call.1} parent=1 // pred_check_branch
      %65 = sbr.rel (0) target = $region25
    $region24: #{tpu_custom_call.1} parent=1 // pred_region
      %66 = dma.done [#allocation6], 256
    $region25: #{tpu_custom_call.1} parent=1 // pred_fallthru
      _
    // Predicated region
    $region26: #{tpu_custom_call.1} parent=1 // pred_check
      _
    $region27: #{tpu_custom_call.1} parent=1 // pred_check_branch
      %68 = sbr.rel (0) target = $region29
    $region28: #{tpu_custom_call.1} parent=1 // pred_region
      %69 = dma.done [#allocation6], 512
    $region29: #{tpu_custom_call.1} parent=1 // pred_fallthru
      _
    // Predicated region
    $region30: #{tpu_custom_call.1} parent=1 // pred_check
      _
    $region31: #{tpu_custom_call.1} parent=1 // pred_check_branch
      %71 = sbr.rel (0) target = $region33
    $region32: #{tpu_custom_call.1} parent=1 // pred_region
      %72 = dma.done [#allocation9], 512
    $region33: #{tpu_custom_call.1} parent=1 // pred_fallthru
      _
    %v73 = vld [vmem:[#allocation5] sm:$0xff]
    %v74 = vld [vmem:[#allocation5 + $0x8] sm:$0xff]
    %v75 = vld [vmem:[#allocation7] sm:$0xff]
    %v76 = vld [vmem:[#allocation7 + $0x8] sm:$0xff]
    %v77 = vld [vmem:[#allocation7 + $0x10] sm:$0xff]
    %v78 = vld [vmem:[#allocation7 + $0x18] sm:$0xff]
    %vm79 = vcmask 261120
    %v81 = vsel %vm79, %v73, 0
    %v84 = vsel %vm79, %v74, 0
    %86 = vmatprep.subr.mxu0 0.0
    %87 = vmatpush1.msra.mxu0 %v75
    %88 = vmatprep.subr.mxu0 0.0
    %89 = vmatpush1.msra.mxu0 %v76
    %90 = vmatprep.subr.mxu0 0.0
    %91 = vmatpush1.msra.mxu0 %v77
    %92 = vmatprep.subr.mxu0 0.0
    %93 = vmatpush1.msra.mxu0 %v78
    %94 = vmatprep.subr.mxu0 0.0
    %95 = vmatpush1.msra.mxu0 0.0
    %96 = vmatprep.subr.mxu0 0.0
    %97 = vmatpush1.msra.mxu0 0.0
    %98 = vmatprep.subr.mxu0 0.0
    %99 = vmatpush1.msra.mxu0 0.0
    %100 = vmatprep.subr.mxu0 0.0
    %101 = vmatpush1.msra.mxu0 0.0
    %102 = vmatprep.subr.mxu0 0.0
    %103 = vmatpush1.msra.mxu0 0.0
    %104 = vmatprep.subr.mxu0 0.0
    %105 = vmatpush1.msra.mxu0 0.0
    %106 = vmatprep.subr.mxu0 0.0
    %107 = vmatpush1.msra.mxu0 0.0
    %108 = vmatprep.subr.mxu0 0.0
    %109 = vmatpush1.msra.mxu0 0.0
    %110 = vmatprep.subr.mxu0 0.0
    %111 = vmatpush1.msra.mxu0 0.0
    %112 = vmatprep.subr.mxu0 0.0
    %113 = vmatpush1.msra.mxu0 0.0
    %114 = vmatprep.subr.mxu0 0.0
    %115 = vmatpush1.msra.mxu0 0.0
    %116 = vmatprep.subr.mxu0 0.0
    %117 = vmatpush1.msra.mxu0 0.0
    %118 = vmatprep.subr.mxu0 0.0
    %119 = vmatpush1.msra.mxu0 0.0
    %120 = vmatprep.subr.mxu0 0.0
    %121 = vmatpush1.msra.mxu0 0.0
    %122 = vmatprep.subr.mxu0 0.0
    %123 = vmatpush1.msra.mxu0 0.0
    %124 = vmatprep.subr.mxu0 0.0
    %125 = vmatpush1.msra.mxu0 0.0
    %126 = vmatprep.subr.mxu0 0.0
    %127 = vmatpush1.msra.mxu0 0.0
    %128 = vmatprep.subr.mxu0 0.0
    %129 = vmatpush1.msra.mxu0 0.0
    %130 = vmatprep.subr.mxu0 0.0
    %131 = vmatpush1.msra.mxu0 0.0
    %132 = vmatprep.subr.mxu0 0.0
    %133 = vmatpush1.msra.mxu0 0.0
    %134 = vmatprep.subr.mxu0 0.0
    %135 = vmatpush1.msra.mxu0 0.0
    %136 = vmatprep.subr.mxu0 0.0
    %137 = vmatpush1.msra.mxu0 0.0
    %138 = vmatprep.subr.mxu0 0.0
    %139 = vmatpush1.msra.mxu0 0.0
    %140 = vmatprep.subr.mxu0 0.0
    %141 = vmatpush1.msra.mxu0 0.0
    %142 = vmatprep.subr.mxu0 0.0
    %143 = vmatpush1.msra.mxu0 0.0
    %144 = vmatprep.subr.mxu0 0.0
    %145 = vmatpush1.msra.mxu0 0.0
    %146 = vmatprep.subr.mxu0 0.0
    %147 = vmatpush1.msra.mxu0 0.0
    %148 = vmatprep.subr.mxu0 0.0
    %149 = vmatpush1.msra.mxu0 0.0
    %150 = vmatprep.mubr.f32.mxu0 0.0
    %151 = vmatmul.mubr.f32.gmra.mrb[0].mxu0 %v81
    %v152 = vpop.f32.mrb[0].mxu0
    %v153 = vadd.f32 0.0, %v152
    %v154 = vpop.f32.mrb[0].mxu0
    %155 = vmatprep.mubr.f32.mxu0 0.0
    %156 = vmatmul.mubr.f32.gmra.mrb[0].mxu0 %v84
    %v157 = vpop.f32.mrb[0].mxu0
    %v158 = vadd.f32 0.0, %v157
    %v159 = vpop.f32.mrb[0].mxu0
    %160 = vdwg.mxu0
    %v161 = vld [vmem:[#allocation2] sm:$0x1]
    %v162 = vld [vmem:[#allocation2 + $0x1] sm:$0x1]
    %v165 = vlaneseq
    %v166 = vshrl.u32 %v165, 7
    %v167 = vsub.s32 0, %v166
    %v168 = vrot.slane %v161, %v167
    %v169 = vlaneseq
    %v170 = vshrl.u32 %v169, 7
    %v171 = vsub.s32 0, %v170
    %v172 = vrot.slane %v162, %v171
    %v175 = vadd.f32 %v153, %v168
    %v176 = vadd.f32 %v158, %v172
    %v177 = vtanh.pop %v175
    %v178 = vtanh.pop %v176
    %v179 = vld [vmem:[#allocation8] sm:$0xff]
    %v180 = vld [vmem:[#allocation8 + $0x8] sm:$0xff]
    %v181 = vld [vmem:[#allocation8 + $0x10] sm:$0xff]
    %v182 = vld [vmem:[#allocation8 + $0x18] sm:$0xff]
    %v184 = vsel %vm79, %v177, 0
    %v187 = vsel %vm79, %v178, 0
    %189 = vmatprep.subr.mxu0 0.0
    %190 = vmatpush1.msra.mxu0 %v179
    %191 = vmatprep.subr.mxu0 0.0
    %192 = vmatpush1.msra.mxu0 %v180
    %193 = vmatprep.subr.mxu0 0.0
    %194 = vmatpush1.msra.mxu0 %v181
    %195 = vmatprep.subr.mxu0 0.0
    %196 = vmatpush1.msra.mxu0 %v182
    %197 = vmatprep.subr.mxu0 0.0
    %198 = vmatpush1.msra.mxu0 0.0
    %199 = vmatprep.subr.mxu0 0.0
    %200 = vmatpush1.msra.mxu0 0.0
    %201 = vmatprep.subr.mxu0 0.0
    %202 = vmatpush1.msra.mxu0 0.0
    %203 = vmatprep.subr.mxu0 0.0
    %204 = vmatpush1.msra.mxu0 0.0
    %205 = vmatprep.subr.mxu0 0.0
    %206 = vmatpush1.msra.mxu0 0.0
    %207 = vmatprep.subr.mxu0 0.0
    %208 = vmatpush1.msra.mxu0 0.0
    %209 = vmatprep.subr.mxu0 0.0
    %210 = vmatpush1.msra.mxu0 0.0
    %211 = vmatprep.subr.mxu0 0.0
    %212 = vmatpush1.msra.mxu0 0.0
    %213 = vmatprep.subr.mxu0 0.0
    %214 = vmatpush1.msra.mxu0 0.0
    %215 = vmatprep.subr.mxu0 0.0
    %216 = vmatpush1.msra.mxu0 0.0
    %217 = vmatprep.subr.mxu0 0.0
    %218 = vmatpush1.msra.mxu0 0.0
    %219 = vmatprep.subr.mxu0 0.0
    %220 = vmatpush1.msra.mxu0 0.0
    %221 = vmatprep.subr.mxu0 0.0
    %222 = vmatpush1.msra.mxu0 0.0
    %223 = vmatprep.subr.mxu0 0.0
    %224 = vmatpush1.msra.mxu0 0.0
    %225 = vmatprep.subr.mxu0 0.0
    %226 = vmatpush1.msra.mxu0 0.0
    %227 = vmatprep.subr.mxu0 0.0
    %228 = vmatpush1.msra.mxu0 0.0
    %229 = vmatprep.subr.mxu0 0.0
    %230 = vmatpush1.msra.mxu0 0.0
    %231 = vmatprep.subr.mxu0 0.0
    %232 = vmatpush1.msra.mxu0 0.0
    %233 = vmatprep.subr.mxu0 0.0
    %234 = vmatpush1.msra.mxu0 0.0
    %235 = vmatprep.subr.mxu0 0.0
    %236 = vmatpush1.msra.mxu0 0.0
    %237 = vmatprep.subr.mxu0 0.0
    %238 = vmatpush1.msra.mxu0 0.0
    %239 = vmatprep.subr.mxu0 0.0
    %240 = vmatpush1.msra.mxu0 0.0
    %241 = vmatprep.subr.mxu0 0.0
    %242 = vmatpush1.msra.mxu0 0.0
    %243 = vmatprep.subr.mxu0 0.0
    %244 = vmatpush1.msra.mxu0 0.0
    %245 = vmatprep.subr.mxu0 0.0
    %246 = vmatpush1.msra.mxu0 0.0
    %247 = vmatprep.subr.mxu0 0.0
    %248 = vmatpush1.msra.mxu0 0.0
    %249 = vmatprep.subr.mxu0 0.0
    %250 = vmatpush1.msra.mxu0 0.0
    %251 = vmatprep.subr.mxu0 0.0
    %252 = vmatpush1.msra.mxu0 0.0
    %253 = vmatprep.mubr.f32.mxu0 0.0
    %254 = vmatmul.mubr.f32.gmra.mrb[0].mxu0 %v184
    %v255 = vpop.f32.mrb[0].mxu0
    %v256 = vadd.f32 0.0, %v255
    %v257 = vpop.f32.mrb[0].mxu0
    %258 = vmatprep.mubr.f32.mxu0 0.0
    %259 = vmatmul.mubr.f32.gmra.mrb[0].mxu0 %v187
    %v260 = vpop.f32.mrb[0].mxu0
    %v261 = vadd.f32 0.0, %v260
    %v262 = vpop.f32.mrb[0].mxu0
    %263 = vdwg.mxu0
    %v264 = vxor.u32 %v256, 2147483648
    %v265 = vxor.u32 %v261, 2147483648
    %v266 = vmul.f32 %v264, 1.442695
    %v267 = vpow.pop %v266
    %v268 = vmul.f32 %v265, 1.442695
    %v269 = vpow.pop %v268
    %v270 = vadd.f32 %v267, 1.0
    %v271 = vadd.f32 %v269, 1.0
    %v272 = vrcp.pop %v270
    %v273 = vmul.f32 1.0, %v272
    %v274 = vrcp.pop %v271
    %v275 = vmul.f32 1.0, %v274
    %v276 = vmul.f32 %v273, %v73
    %v277 = vmul.f32 %v275, %v74
    %278 = vst.msk [vmem:[#allocation10] sm:$0xff] %vm79, %v276
    %279 = vst.msk [vmem:[#allocation10 + $0x8] sm:$0xff] %vm79, %v277
    // Predicated region
    $region34: #{tpu_custom_call.1} parent=1 // pred_check
      _
    $region35: #{tpu_custom_call.1} parent=1 // pred_check_branch
      %281 = sbr.rel (0) target = $region37
    $region36: #{tpu_custom_call.1} parent=1 // pred_region
      %s283 = ssub.s32 256, 256
      %284 = vsyncadd [#allocation4], %s283
      %s285 = sshll.u32 [#allocation10], 4
      %s286 = int_to_ptr.vmem [resolvable:$true] %s285
      %291 = dma.vmem_to_hbm [thread:$0]  %s286, 256, %s4, [#allocation4], 128, 128, 8
    $region37: #{tpu_custom_call.1} parent=1 // pred_fallthru
      _
    // Predicated region
    $region38: #{tpu_custom_call.1} parent=1 // pred_check
      _
    $region39: #{tpu_custom_call.1} parent=1 // pred_check_branch
      %293 = sbr.rel (0) target = $region41
    $region40: #{tpu_custom_call.1} parent=1 // pred_region
      %294 = dma.done [#allocation4], 256
    $region41: #{tpu_custom_call.1} parent=1 // pred_fallthru
      _
    %295 = vsyncpa [#allocation3], 1
    %296 = vsyncpa [#allocation6], 1
    %297 = vsyncpa [#allocation9], 1
    %298 = vsyncpa [#allocation4], 1

</llo_original>
